<compile_context>
chip_gen: v7x
topology: tpu7x:2x2x1
jax: 0.10.0
libtpu: 0.0.40
codegen_flags: <defaults>
</compile_context>

<pallas_src>
import math
import jax
import jax.numpy as jnp
from jax import lax
from jax.experimental import pallas as pl
from jax.experimental.pallas import tpu as pltpu


def mlp_kernel(x_ref, w1_ref, b1_ref, w2_ref, b2_ref, w3_ref, b3_ref, o_ref):
    # fc1 + relu: contract the 128-feature axis of BOTH operands so the MXU
    # consumes x in its natural (rows, 128) layout -- no materialized x.T.
    # w1: (32, 128), x: (rows, 128) -> h1: (32, rows)   (batch on lanes)
    h1 = lax.dot_general(
        w1_ref[...], x_ref[...],
        dimension_numbers=(((1,), (1,)), ((), ())),
        preferred_element_type=jnp.float32)
    h1 = jnp.maximum(h1 + b1_ref[...], 0.0)               # b1: (32, 1) bcast over lanes
    # fc2 + relu: (8, 32) @ (32, rows) -> (8, rows)
    # TODO(synk): bundle-verify whether the per-step MXU weight swap for this
    # tiny (8,32) matmul sits on the critical path; if so move it to the VPU.
    h2 = jnp.dot(w2_ref[...], h1, preferred_element_type=jnp.float32)
    h2 = jnp.maximum(h2 + b2_ref[...], 0.0)                # b2: (8, 1)
    # fc3 (K=8, N=1): VPU multiply + sublane reduce -> lane-dense (1, rows).
    h3 = jnp.sum(h2 * w3_ref[...], axis=0, keepdims=True) + b3_ref[...]
    o_ref[...] = h3.astype(o_ref.dtype)


def target_mlp_pallas(x, w1, b1, w2, b2, w3, b3, *, tile_b=8192):
    """x: (B, 128) f32; weights/biases in PyTorch nn.Linear layout:
    w1 (32,128), b1 (32,), w2 (8,32), b2 (8,), w3 (1,8), b3 (1,)."""
    B, D = x.shape
    assert D == 128

    # Kernel-layout params (tiny, one-time XLA-side reshapes).
    b1k = b1.reshape(32, 1)
    b2k = b2.reshape(8, 1)
    w3k = w3.reshape(1, 8).T        # (8, 1): fc3 as VPU mul + sublane reduce
    b3k = b3.reshape(1, 1)

    # --- batch tile selection --------------------------------------------
    # Multiple of 128 rows, capped by tile_b (8192 rows = 4 MiB f32 tile).
    tile = max(128, min(tile_b, pl.cdiv(B, 128) * 128))
    # Keep >= 2 grid steps when B >= 256 so v7x's 2 TensorCores both get work.
    if B >= 256:
        tile = max(128, min(tile, pl.cdiv(pl.cdiv(B, 2), 128) * 128))
    if tile >= B:
        # Single block covering the full (possibly ragged) batch: block shape
        # equal to the array dims is always legal, no padding needed.
        tile = B
    grid = (pl.cdiv(B, tile),)
    # Ragged tail (B % tile != 0) is a partial last block: out-of-bounds input
    # rows are undefined garbage (row-independent, never read back) and
    # out-of-bounds output lanes are discarded by Pallas.

    full = lambda a: pl.BlockSpec(a.shape, lambda i: (0,) * a.ndim)

    cost = pl.CostEstimate(
        flops=2 * B * (128 * 32 + 32 * 8 + 8),
        transcendentals=0,
        bytes_accessed=(B * 128 + B) * 4
        + 4 * (128 * 32 + 32 + 32 * 8 + 8 + 8 + 1),
    )

    out_t = pl.pallas_call(
        mlp_kernel,
        out_shape=jax.ShapeDtypeStruct((1, B), jnp.float32),
        grid_spec=pltpu.PrefetchScalarGridSpec(
            num_scalar_prefetch=0,
            grid=grid,
            in_specs=[
                pl.BlockSpec((tile, 128), lambda i: (i, 0)),   # x batch tile
                full(w1), full(b1k),
                full(w2), full(b2k),
                full(w3k), full(b3k),
            ],
            # Lane-dense output: batch on the 128-lane axis.
            out_specs=pl.BlockSpec((1, tile), lambda i: (0, i)),
        ),
        compiler_params=pltpu.CompilerParams(
            dimension_semantics=("parallel",),      # shard batch across TCs (v7x)
            vmem_limit_bytes=32 * 1024 * 1024),
        cost_estimate=cost,
    )(x, w1, b1k, w2, b2k, w3k, b3k)

    # Back to the PyTorch output shape (B, 1).
    return out_t[0, :].reshape(B, 1)


def init_linear(key, fan_in, fan_out):
    """PyTorch nn.Linear default init, PyTorch layout: w (out,in), b (out,)."""
    kw, kb = jax.random.split(key)
    bound = 1.0 / math.sqrt(fan_in)
    w = jax.random.uniform(kw, (fan_out, fan_in), jnp.float32, -bound, bound)
    b = jax.random.uniform(kb, (fan_out,), jnp.float32, -bound, bound)
    return w, b


def reference_mlp(x, w1, b1, w2, b2, w3, b3):
    h = jnp.maximum(x @ w1.T + b1, 0.0)
    h = jnp.maximum(h @ w2.T + b2, 0.0)
    return h @ w3.T + b3


if __name__ == "__main__":
    key = jax.random.PRNGKey(0)
    kx, k1, k2, k3 = jax.random.split(key, 4)

    w1, b1 = init_linear(k1, 128, 32)
    w2, b2 = init_linear(k2, 32, 8)
    w3, b3 = init_linear(k3, 8, 1)

    # Small demo batch: single ragged block, grid=(1,).
    B = 8
    x = jax.random.normal(kx, (B, 128), jnp.float32)
    out = target_mlp_pallas(x, w1, b1, w2, b2, w3, b3)
    jax.block_until_ready(out)
    ref = reference_mlp(x, w1, b1, w2, b2, w3, b3)
    assert out.shape == (B, 1)
    assert jnp.allclose(out, ref, atol=1e-5, rtol=1e-5)

    # Ragged multi-tile path (grid=(2,), partial last block) -- previously untested.
    B2 = 300
    x2 = jax.random.normal(kx, (B2, 128), jnp.float32)
    out2 = target_mlp_pallas(x2, w1, b1, w2, b2, w3, b3)
    jax.block_until_ready(out2)
    ref2 = reference_mlp(x2, w1, b1, w2, b2, w3, b3)
    assert out2.shape == (B2, 1)
    assert jnp.allclose(out2, ref2, atol=1e-5, rtol=1e-5)

    print("KERNEL_OK")
</pallas_src>

<mosaic_0001>
module attributes {stable_mosaic.version = 11 : i64} {
  func.func @mlp_kernel(%arg0: i32, %arg1: memref<8x128xf32, #tpu.memory_space<vmem>>, %arg2: memref<32x128xf32, #tpu.memory_space<vmem>>, %arg3: memref<32x1xf32, #tpu.memory_space<vmem>>, %arg4: memref<8x32xf32, #tpu.memory_space<vmem>>, %arg5: memref<8x1xf32, #tpu.memory_space<vmem>>, %arg6: memref<8x1xf32, #tpu.memory_space<vmem>>, %arg7: memref<1x1xf32, #tpu.memory_space<vmem>>, %arg8: memref<1x8xf32, #tpu.memory_space<vmem>>) attributes {dimension_semantics = [#tpu.dimension_semantics<parallel>], iteration_bounds = array<i64: 1>, scalar_prefetch = 0 : i64, scratch_operands = 0 : i64, tpu.core_type = #tpu.core_type<tc>, window_params = [{transform_indices = @transform_0, window_bounds = array<i64: 8, 128>}, {pipeline_mode = #tpu.pipeline_mode<synchronous>, transform_indices = @transform_1, window_bounds = array<i64: 32, 128>}, {pipeline_mode = #tpu.pipeline_mode<synchronous>, transform_indices = @transform_2, window_bounds = array<i64: 32, 1>}, {pipeline_mode = #tpu.pipeline_mode<synchronous>, transform_indices = @transform_3, window_bounds = array<i64: 8, 32>}, {pipeline_mode = #tpu.pipeline_mode<synchronous>, transform_indices = @transform_4, window_bounds = array<i64: 8, 1>}, {pipeline_mode = #tpu.pipeline_mode<synchronous>, transform_indices = @transform_5, window_bounds = array<i64: 8, 1>}, {pipeline_mode = #tpu.pipeline_mode<synchronous>, transform_indices = @transform_6, window_bounds = array<i64: 1, 1>}, {transform_indices = @transform_7, window_bounds = array<i64: 1, 8>}]} {
    %c0 = arith.constant 0 : index
    %c0_0 = arith.constant 0 : index
    %0 = vector.load %arg2[%c0, %c0_0] : memref<32x128xf32, #tpu.memory_space<vmem>>, vector<32x128xf32>
    %c0_1 = arith.constant 0 : index
    %c0_2 = arith.constant 0 : index
    %1 = vector.load %arg1[%c0_1, %c0_2] : memref<8x128xf32, #tpu.memory_space<vmem>>, vector<8x128xf32>
    %cst = arith.constant dense<0.000000e+00> : vector<32x8xf32>
    %2 = tpu.matmul %0, %1, %cst {dimension_numbers = #tpu.dot_dimension_numbers<[1], [1], [0], [0], [0, 0, 1, 0], [], []>} : vector<32x128xf32>, vector<8x128xf32>, vector<32x8xf32> -> vector<32x8xf32>
    %c0_3 = arith.constant 0 : index
    %c0_4 = arith.constant 0 : index
    %3 = vector.load %arg3[%c0_3, %c0_4] : memref<32x1xf32, #tpu.memory_space<vmem>>, vector<32x1xf32>
    %4 = vector.broadcast %3 : vector<32x1xf32> to vector<32x8xf32>
    %5 = arith.addf %2, %4 : vector<32x8xf32>
    %cst_5 = arith.constant 0.000000e+00 : f32
    %6 = vector.broadcast %cst_5 : f32 to vector<32x8xf32>
    %7 = arith.maximumf %5, %6 : vector<32x8xf32>
    %c0_6 = arith.constant 0 : index
    %c0_7 = arith.constant 0 : index
    %8 = vector.load %arg4[%c0_6, %c0_7] : memref<8x32xf32, #tpu.memory_space<vmem>>, vector<8x32xf32>
    %cst_8 = arith.constant dense<0.000000e+00> : vector<8x8xf32>
    %9 = tpu.matmul %8, %7, %cst_8 {dimension_numbers = #tpu.dot_dimension_numbers<[1], [0], [0], [1], [0, 0, 1, 1], [], []>} : vector<8x32xf32>, vector<32x8xf32>, vector<8x8xf32> -> vector<8x8xf32>
    %c0_9 = arith.constant 0 : index
    %c0_10 = arith.constant 0 : index
    %10 = vector.load %arg5[%c0_9, %c0_10] : memref<8x1xf32, #tpu.memory_space<vmem>>, vector<8x1xf32>
    %11 = vector.broadcast %10 : vector<8x1xf32> to vector<8x8xf32>
    %12 = arith.addf %9, %11 : vector<8x8xf32>
    %cst_11 = arith.constant 0.000000e+00 : f32
    %13 = vector.broadcast %cst_11 : f32 to vector<8x8xf32>
    %14 = arith.maximumf %12, %13 : vector<8x8xf32>
    %c0_12 = arith.constant 0 : index
    %c0_13 = arith.constant 0 : index
    %15 = vector.load %arg6[%c0_12, %c0_13] : memref<8x1xf32, #tpu.memory_space<vmem>>, vector<8x1xf32>
    %16 = vector.broadcast %15 : vector<8x1xf32> to vector<8x8xf32>
    %17 = arith.mulf %14, %16 : vector<8x8xf32>
    %cst_14 = arith.constant dense<0.000000e+00> : vector<8xf32>
    %18 = vector.multi_reduction <add>, %17, %cst_14 [0] : vector<8x8xf32> to vector<8xf32>
    %19 = vector.shape_cast %18 : vector<8xf32> to vector<1x8xf32>
    %c0_15 = arith.constant 0 : index
    %c0_16 = arith.constant 0 : index
    %20 = vector.load %arg7[%c0_15, %c0_16] : memref<1x1xf32, #tpu.memory_space<vmem>>, vector<1x1xf32>
    %21 = vector.broadcast %20 : vector<1x1xf32> to vector<1x8xf32>
    %22 = arith.addf %19, %21 : vector<1x8xf32>
    %c0_17 = arith.constant 0 : index
    %c0_18 = arith.constant 0 : index
    %23 = vector.load %arg8[%c0_17, %c0_18] : memref<1x8xf32, #tpu.memory_space<vmem>>, vector<1x8xf32>
    tpu.vector_store %arg8[%c0_17, %c0_18], %22 {strides = array<i32>} : memref<1x8xf32, #tpu.memory_space<vmem>>, vector<1x8xf32>,
    return
  }
  func.func @transform_0(%arg0: i32) -> (i32, i32) {
    %c0_i32 = arith.constant 0 : i32
    %c0_i32_0 = arith.constant 0 : i32
    return %arg0, %c0_i32 : i32, i32
  }
  func.func @transform_1(%arg0: i32) -> (i32, i32) {
    %c0_i32 = arith.constant 0 : i32
    %c0_i32_0 = arith.constant 0 : i32
    %c0_i32_1 = arith.constant 0 : i32
    return %c0_i32, %c0_i32_0 : i32, i32
  }
  func.func @transform_2(%arg0: i32) -> (i32, i32) {
    %c0_i32 = arith.constant 0 : i32
    %c0_i32_0 = arith.constant 0 : i32
    %c0_i32_1 = arith.constant 0 : i32
    return %c0_i32, %c0_i32_0 : i32, i32
  }
  func.func @transform_3(%arg0: i32) -> (i32, i32) {
    %c0_i32 = arith.constant 0 : i32
    %c0_i32_0 = arith.constant 0 : i32
    %c0_i32_1 = arith.constant 0 : i32
    return %c0_i32, %c0_i32_0 : i32, i32
  }
  func.func @transform_4(%arg0: i32) -> (i32, i32) {
    %c0_i32 = arith.constant 0 : i32
    %c0_i32_0 = arith.constant 0 : i32
    %c0_i32_1 = arith.constant 0 : i32
    return %c0_i32, %c0_i32_0 : i32, i32
  }
  func.func @transform_5(%arg0: i32) -> (i32, i32) {
    %c0_i32 = arith.constant 0 : i32
    %c0_i32_0 = arith.constant 0 : i32
    %c0_i32_1 = arith.constant 0 : i32
    return %c0_i32, %c0_i32_0 : i32, i32
  }
  func.func @transform_6(%arg0: i32) -> (i32, i32) {
    %c0_i32 = arith.constant 0 : i32
    %c0_i32_0 = arith.constant 0 : i32
    %c0_i32_1 = arith.constant 0 : i32
    return %c0_i32, %c0_i32_0 : i32, i32
  }
  func.func @transform_7(%arg0: i32) -> (i32, i32) {
    %c0_i32 = arith.constant 0 : i32
    %c0_i32_0 = arith.constant 0 : i32
    return %c0_i32, %arg0 : i32, i32
  }
}

</mosaic_0001>

<llo_original>
// kernel: tpu_custom_call.1
$region0: #{tpu_custom_call.1}
  #allocation0 [shape = 'u32[]', space=smem, size = 0x4, offset = 0x4, fixed_abs, tag = 'smem constant byte address 0x4 - core index']
  #allocation1 [shape = 'u32[144,128]{1,0:T(1,128)}', space=vmem, size = 0x12000, scoped, tag = 'internal scratch']
  #allocation2 [shape = 'f32[1,1]{1,0:T(1,128)S(1)}', space=vmem, size = 0x200, scoped, tag = 'scoped memory for tpu_custom_call.1']
  %s0 = inlined_call_operand.vmem [shape: f32[8,128], index: 0, kind: input, shape index: {}]
  %s1 = inlined_call_operand.vmem [shape: f32[32,128], index: 1, kind: input, shape index: {}]
  %s2 = inlined_call_operand.vmem [shape: f32[32,1], index: 2, kind: input, shape index: {}]
  %s3 = inlined_call_operand.vmem [shape: f32[8,32], index: 3, kind: input, shape index: {}]
  %s4 = inlined_call_operand.vmem [shape: f32[8,1], index: 4, kind: input, shape index: {}]
  %s5 = inlined_call_operand.vmem [shape: f32[8,1], index: 5, kind: input, shape index: {}]
  %s6 = inlined_call_operand.<no memory space> [shape: f32[1,1], index: 6, kind: input, shape index: {}]
  %s7 = inlined_call_operand.hbm [shape: f32[1,8], index: 7, kind: output, shape index: {}]
  %s8 = sld [smem:[#allocation0]]
  $region38: #{tpu_custom_call.1} parent=0
    _
  %s10 = ssub.s32 1, %s8
  %s11 = scalar_select 0, %s10, %s8
  %v12 = vstv %s6
  %13 = vst [vmem:[#allocation2] sm:$0x1] %v12
  $region1: #{tpu_custom_call.1} parent=0
    #allocation3 [shape = 'u8[512]{0}', space=vmem, size = 0x400, scoped, tag = 'output window, operand 0, single buffered']
    #allocation4 [shape = 's32[1]{0}', space=sflag, size = 0x4, scoped, tag = 'scoped memory for tpu_custom_call.1']
    %14 = vsyncpa [#allocation4], 0
    // Predicated region
    $region2: #{tpu_custom_call.1} parent=1 // pred_check
      _
    $region3: #{tpu_custom_call.1} parent=1 // pred_check_branch
      %16 = sbr.rel (0) target = $region5
    $region4: #{tpu_custom_call.1} parent=1 // pred_region
      _
    $region5: #{tpu_custom_call.1} parent=1 // pred_fallthru
      _
    // Predicated region
    $region6: #{tpu_custom_call.1} parent=1 // pred_check
      _
    $region7: #{tpu_custom_call.1} parent=1 // pred_check_branch
      %18 = sbr.rel (0) target = $region9
    $region8: #{tpu_custom_call.1} parent=1 // pred_region
      _
    $region9: #{tpu_custom_call.1} parent=1 // pred_fallthru
      _
    // Predicated region
    $region10: #{tpu_custom_call.1} parent=1 // pred_check
      _
    $region11: #{tpu_custom_call.1} parent=1 // pred_check_branch
      %20 = sbr.rel (0) target = $region13
    $region12: #{tpu_custom_call.1} parent=1 // pred_region
      _
    $region13: #{tpu_custom_call.1} parent=1 // pred_fallthru
      _
    // Predicated region
    $region14: #{tpu_custom_call.1} parent=1 // pred_check
      _
    $region15: #{tpu_custom_call.1} parent=1 // pred_check_branch
      %22 = sbr.rel (0) target = $region17
    $region16: #{tpu_custom_call.1} parent=1 // pred_region
      _
    $region17: #{tpu_custom_call.1} parent=1 // pred_fallthru
      _
    // Predicated region
    $region18: #{tpu_custom_call.1} parent=1 // pred_check
      _
    $region19: #{tpu_custom_call.1} parent=1 // pred_check_branch
      %24 = sbr.rel (0) target = $region21
    $region20: #{tpu_custom_call.1} parent=1 // pred_region
      _
    $region21: #{tpu_custom_call.1} parent=1 // pred_fallthru
      _
    // Predicated region
    $region22: #{tpu_custom_call.1} parent=1 // pred_check
      _
    $region23: #{tpu_custom_call.1} parent=1 // pred_check_branch
      %26 = sbr.rel (0) target = $region25
    $region24: #{tpu_custom_call.1} parent=1 // pred_region
      _
    $region25: #{tpu_custom_call.1} parent=1 // pred_fallthru
      _
    // Predicated region
    $region26: #{tpu_custom_call.1} parent=1 // pred_check
      _
    $region27: #{tpu_custom_call.1} parent=1 // pred_check_branch
      %28 = sbr.rel (0) target = $region29
    $region28: #{tpu_custom_call.1} parent=1 // pred_region
      _
    $region29: #{tpu_custom_call.1} parent=1 // pred_fallthru
      _
    %v29 = vld [vmem:[%s1] sm:$0xff]
    %v30 = vld [vmem:[%s1 + $0x8] sm:$0xff]
    %v31 = vld [vmem:[%s1 + $0x10] sm:$0xff]
    %v32 = vld [vmem:[%s1 + $0x18] sm:$0xff]
    %v33 = vld [vmem:[%s0] sm:$0xff]
    %v34 = vld [vmem:[%s2] sm:$0xff]
    %v35 = vld [vmem:[%s2 + $0x8] sm:$0xff]
    %v36 = vld [vmem:[%s2 + $0x10] sm:$0xff]
    %v37 = vld [vmem:[%s2 + $0x18] sm:$0xff]
    %39 = vset.pattern.permute.xlu0 0
    %40 = vperm.xlu0 %39, %v34
    %v41 = vpop.permute.xlu0 %40
    %44 = vset.pattern.permute.xlu0 0
    %45 = vperm.xlu0 %44, %v35
    %v46 = vpop.permute.xlu0 %45
    %49 = vset.pattern.permute.xlu0 0
    %50 = vperm.xlu0 %49, %v36
    %v51 = vpop.permute.xlu0 %50
    %54 = vset.pattern.permute.xlu0 0
    %55 = vperm.xlu0 %54, %v37
    %v56 = vpop.permute.xlu0 %55
    %58 = vmatprep.subr.mxu0 0.0
    %59 = vmatpush1.xpose.msra.mxu0 %v33
    %60 = vmatprep.subr.mxu0 0.0
    %61 = vmatpush1.xpose.msra.mxu0 0.0
    %62 = vmatprep.subr.mxu0 0.0
    %63 = vmatpush1.xpose.msra.mxu0 0.0
    %64 = vmatprep.subr.mxu0 0.0
    %65 = vmatpush1.xpose.msra.mxu0 0.0
    %66 = vmatprep.subr.mxu0 0.0
    %67 = vmatpush1.xpose.msra.mxu0 0.0
    %68 = vmatprep.subr.mxu0 0.0
    %69 = vmatpush1.xpose.msra.mxu0 0.0
    %70 = vmatprep.subr.mxu0 0.0
    %71 = vmatpush1.xpose.msra.mxu0 0.0
    %72 = vmatprep.subr.mxu0 0.0
    %73 = vmatpush1.xpose.msra.mxu0 0.0
    %74 = vmatprep.subr.mxu0 0.0
    %75 = vmatpush1.xpose.msra.mxu0 0.0
    %76 = vmatprep.subr.mxu0 0.0
    %77 = vmatpush1.xpose.msra.mxu0 0.0
    %78 = vmatprep.subr.mxu0 0.0
    %79 = vmatpush1.xpose.msra.mxu0 0.0
    %80 = vmatprep.subr.mxu0 0.0
    %81 = vmatpush1.xpose.msra.mxu0 0.0
    %82 = vmatprep.subr.mxu0 0.0
    %83 = vmatpush1.xpose.msra.mxu0 0.0
    %84 = vmatprep.subr.mxu0 0.0
    %85 = vmatpush1.xpose.msra.mxu0 0.0
    %86 = vmatprep.subr.mxu0 0.0
    %87 = vmatpush1.xpose.msra.mxu0 0.0
    %88 = vmatprep.subr.mxu0 0.0
    %89 = vmatpush1.xpose.msra.mxu0 0.0
    %90 = vmatprep.subr.mxu0 0.0
    %91 = vmatpush1.xpose.msra.mxu0 0.0
    %92 = vmatprep.subr.mxu0 0.0
    %93 = vmatpush1.xpose.msra.mxu0 0.0
    %94 = vmatprep.subr.mxu0 0.0
    %95 = vmatpush1.xpose.msra.mxu0 0.0
    %96 = vmatprep.subr.mxu0 0.0
    %97 = vmatpush1.xpose.msra.mxu0 0.0
    %98 = vmatprep.subr.mxu0 0.0
    %99 = vmatpush1.xpose.msra.mxu0 0.0
    %100 = vmatprep.subr.mxu0 0.0
    %101 = vmatpush1.xpose.msra.mxu0 0.0
    %102 = vmatprep.subr.mxu0 0.0
    %103 = vmatpush1.xpose.msra.mxu0 0.0
    %104 = vmatprep.subr.mxu0 0.0
    %105 = vmatpush1.xpose.msra.mxu0 0.0
    %106 = vmatprep.subr.mxu0 0.0
    %107 = vmatpush1.xpose.msra.mxu0 0.0
    %108 = vmatprep.subr.mxu0 0.0
    %109 = vmatpush1.xpose.msra.mxu0 0.0
    %110 = vmatprep.subr.mxu0 0.0
    %111 = vmatpush1.xpose.msra.mxu0 0.0
    %112 = vmatprep.subr.mxu0 0.0
    %113 = vmatpush1.xpose.msra.mxu0 0.0
    %114 = vmatprep.subr.mxu0 0.0
    %115 = vmatpush1.xpose.msra.mxu0 0.0
    %116 = vmatprep.subr.mxu0 0.0
    %117 = vmatpush1.xpose.msra.mxu0 0.0
    %118 = vmatprep.subr.mxu0 0.0
    %119 = vmatpush1.xpose.msra.mxu0 0.0
    %120 = vmatprep.subr.mxu0 0.0
    %121 = vmatpush1.xpose.msra.mxu0 0.0
    %122 = vmatprep.mubr.f32.mxu0 0.0
    %123 = vmatmul.mubr.f32.gmra.mrb[0].mxu0 %v29
    %v124 = vpop.f32.mrb[0].mxu0
    %v125 = vadd.f32 %v41, %v124
    %v126 = vpop.f32.mrb[0].mxu0
    %127 = vmatprep.mubr.f32.mxu0 0.0
    %128 = vmatmul.mubr.f32.gmra.mrb[0].mxu0 %v30
    %v129 = vpop.f32.mrb[0].mxu0
    %v130 = vadd.f32 %v46, %v129
    %v131 = vpop.f32.mrb[0].mxu0
    %132 = vmatprep.mubr.f32.mxu0 0.0
    %133 = vmatmul.mubr.f32.gmra.mrb[0].mxu0 %v31
    %v134 = vpop.f32.mrb[0].mxu0
    %v135 = vadd.f32 %v51, %v134
    %v136 = vpop.f32.mrb[0].mxu0
    %137 = vmatprep.mubr.f32.mxu0 0.0
    %138 = vmatmul.mubr.f32.gmra.mrb[0].mxu0 %v32
    %v139 = vpop.f32.mrb[0].mxu0
    %v140 = vadd.f32 %v56, %v139
    %v141 = vpop.f32.mrb[0].mxu0
    %142 = vdwg.mxu0
    %v143 = vmax.f32 %v125, 0.0
    %v144 = vmax.f32 %v130, 0.0
    %v145 = vmax.f32 %v135, 0.0
    %v146 = vmax.f32 %v140, 0.0
    %v147 = vld [vmem:[%s3] sm:$0xff]
    %v148 = vld [vmem:[%s4] sm:$0xff]
    %150 = vset.pattern.permute.xlu0 0
    %151 = vperm.xlu0 %150, %v148
    %v152 = vpop.permute.xlu0 %151
    %vm154 = vcmask 261120
    %v156 = vsel %vm154, %v147, 0
    %158 = vmatprep.subr.mxu0 0.0
    %159 = vmatpush1.msra.mxu0 %v143
    %160 = vmatprep.subr.mxu0 0.0
    %161 = vmatpush1.msra.mxu0 %v144
    %162 = vmatprep.subr.mxu0 0.0
    %163 = vmatpush1.msra.mxu0 %v145
    %164 = vmatprep.subr.mxu0 0.0
    %165 = vmatpush1.msra.mxu0 %v146
    %166 = vmatprep.subr.mxu0 0.0
    %167 = vmatpush1.msra.mxu0 0.0
    %168 = vmatprep.subr.mxu0 0.0
    %169 = vmatpush1.msra.mxu0 0.0
    %170 = vmatprep.subr.mxu0 0.0
    %171 = vmatpush1.msra.mxu0 0.0
    %172 = vmatprep.subr.mxu0 0.0
    %173 = vmatpush1.msra.mxu0 0.0
    %174 = vmatprep.subr.mxu0 0.0
    %175 = vmatpush1.msra.mxu0 0.0
    %176 = vmatprep.subr.mxu0 0.0
    %177 = vmatpush1.msra.mxu0 0.0
    %178 = vmatprep.subr.mxu0 0.0
    %179 = vmatpush1.msra.mxu0 0.0
    %180 = vmatprep.subr.mxu0 0.0
    %181 = vmatpush1.msra.mxu0 0.0
    %182 = vmatprep.subr.mxu0 0.0
    %183 = vmatpush1.msra.mxu0 0.0
    %184 = vmatprep.subr.mxu0 0.0
    %185 = vmatpush1.msra.mxu0 0.0
    %186 = vmatprep.subr.mxu0 0.0
    %187 = vmatpush1.msra.mxu0 0.0
    %188 = vmatprep.subr.mxu0 0.0
    %189 = vmatpush1.msra.mxu0 0.0
    %190 = vmatprep.subr.mxu0 0.0
    %191 = vmatpush1.msra.mxu0 0.0
    %192 = vmatprep.subr.mxu0 0.0
    %193 = vmatpush1.msra.mxu0 0.0
    %194 = vmatprep.subr.mxu0 0.0
    %195 = vmatpush1.msra.mxu0 0.0
    %196 = vmatprep.subr.mxu0 0.0
    %197 = vmatpush1.msra.mxu0 0.0
    %198 = vmatprep.subr.mxu0 0.0
    %199 = vmatpush1.msra.mxu0 0.0
    %200 = vmatprep.subr.mxu0 0.0
    %201 = vmatpush1.msra.mxu0 0.0
    %202 = vmatprep.subr.mxu0 0.0
    %203 = vmatpush1.msra.mxu0 0.0
    %204 = vmatprep.subr.mxu0 0.0
    %205 = vmatpush1.msra.mxu0 0.0
    %206 = vmatprep.subr.mxu0 0.0
    %207 = vmatpush1.msra.mxu0 0.0
    %208 = vmatprep.subr.mxu0 0.0
    %209 = vmatpush1.msra.mxu0 0.0
    %210 = vmatprep.subr.mxu0 0.0
    %211 = vmatpush1.msra.mxu0 0.0
    %212 = vmatprep.subr.mxu0 0.0
    %213 = vmatpush1.msra.mxu0 0.0
    %214 = vmatprep.subr.mxu0 0.0
    %215 = vmatpush1.msra.mxu0 0.0
    %216 = vmatprep.subr.mxu0 0.0
    %217 = vmatpush1.msra.mxu0 0.0
    %218 = vmatprep.subr.mxu0 0.0
    %219 = vmatpush1.msra.mxu0 0.0
    %220 = vmatprep.subr.mxu0 0.0
    %221 = vmatpush1.msra.mxu0 0.0
    %222 = vmatprep.mubr.f32.mxu0 0.0
    %223 = vmatmul.mubr.f32.gmra.mrb[0].mxu0 %v156
    %v224 = vpop.f32.mrb[0].mxu0
    %v225 = vadd.f32 %v152, %v224
    %v226 = vpop.f32.mrb[0].mxu0
    %227 = vdwg.mxu0
    %v228 = vmax.f32 %v225, 0.0
    %v229 = vld [vmem:[%s5] sm:$0xff]
    %231 = vset.pattern.permute.xlu0 0
    %232 = vperm.xlu0 %231, %v229
    %v233 = vpop.permute.xlu0 %232
    %v235 = vmul.f32 %v228, %v233
    %vm236 = vcmask 64512
    %v237 = vsel %vm236, %v235, 0.0
    %v238 = vrot.slane %v237, 4
    %v239 = vadd.f32 %v237, %v238
    %v240 = vrot.slane %v239, 2
    %v241 = vadd.f32 %v239, %v240
    %v242 = vrot.slane %v241, 1
    %v243 = vadd.f32 %v241, %v242
    %v244 = vld [vmem:[#allocation2] sm:$0x1]
    %246 = vset.pattern.permute.xlu0 0
    %247 = vperm.xlu0 %246, %v244
    %v248 = vpop.permute.xlu0 %247
    %v250 = vlaneseq
    %v251 = vshrl.u32 %v250, 7
    %v252 = vsub.s32 0, %v251
    %v253 = vrot.slane %v248, %v252
    %v254 = vadd.f32 %v243, %v253
    %vm255 = vcmask 57344
    %256 = vst.msk [vmem:[#allocation3] sm:$0x1] %vm255, %v254
    // Predicated region
    $region30: #{tpu_custom_call.1} parent=1 // pred_check
      _
    $region31: #{tpu_custom_call.1} parent=1 // pred_check_branch
      %258 = sbr.rel (0) target = $region33
    $region32: #{tpu_custom_call.1} parent=1 // pred_region
      %s260 = ssub.s32 16, 16
      %261 = vsyncadd [#allocation4], %s260
      %s263 = sshll.u32 [#allocation3], 4
      %s264 = int_to_ptr.vmem [resolvable:$true] %s263
      %266 = dma.vmem_to_hbm [thread:$0]  %s264, 16, %s7, [#allocation4]
    $region33: #{tpu_custom_call.1} parent=1 // pred_fallthru
      _
    // Predicated region
    $region34: #{tpu_custom_call.1} parent=1 // pred_check
      _
    $region35: #{tpu_custom_call.1} parent=1 // pred_check_branch
      %268 = sbr.rel (0) target = $region37
    $region36: #{tpu_custom_call.1} parent=1 // pred_region
      %269 = dma.done [#allocation4], 16
    $region37: #{tpu_custom_call.1} parent=1 // pred_fallthru
      _
    %270 = vsyncpa [#allocation4], 1

</llo_original>
